<compile_context>
chip_gen: v5e
topology: v5e:2x2
jax: 0.10.0
libtpu: 0.0.40
codegen_flags: <defaults>
</compile_context>

<pallas_src>
import jax
import jax.numpy as jnp
from jax.experimental import pallas as pl
from jax.experimental.pallas import tpu as pltpu

F = 8              # in = out features of nn.Linear(8, 8)
GROUP = 16         # samples packed per 128-lane row
LANES = GROUP * F  # 128
TR_DEFAULT = 512   # row tile (512 x 128 f32 = 256 KiB per input tile)


def _round_up(a, m):
    return ((a + m - 1) // m) * m


def linear_relu_kernel(x_ref, w_ref, b_ref, o_ref):
    """x_ref: (TR, 128) packed inputs; w_ref: (128, 128) block-diag kron(I16, W.T);
    b_ref: (1, 128) tiled effective bias; o_ref: (TR, 128) packed outputs."""
    y = jnp.dot(x_ref[...], w_ref[...], preferred_element_type=jnp.float32)
    o_ref[...] = jnp.maximum(y + b_ref[...], 0.0)


def untraceable_submodule(x, w, b, *, tr=TR_DEFAULT):
    """x: (B, 8) f32, w: (8, 8) f32 (out, in), b: (8,) f32 -> (B, 8) f32."""
    B, feat = x.shape
    assert feat == F and w.shape == (F, F) and b.shape == (F,)

    x = x.astype(jnp.float32)
    w = w.astype(jnp.float32)
    b = b.astype(jnp.float32)

    # Fold the data-dependent "+1" branch into an effective bias (computed on
    # the *unpadded* x):  relu(W(x+s) + b) == relu(Wx + (b + s * rowsum(W))).
    shift = jnp.where(jnp.max(x) < 0.0, jnp.float32(1.0), jnp.float32(0.0))
    b_eff = b + shift * jnp.sum(w, axis=1)                       # (F,)

    # Lane-dense packing: 16 samples per 128-lane row. The per-sample linear
    # becomes one (TR,128)@(128,128) matmul with a block-diagonal weight.
    w_big = jnp.kron(jnp.eye(GROUP, dtype=jnp.float32), w.T)     # (128, 128)
    b_big = jnp.tile(b_eff, GROUP).reshape(1, LANES)             # (1, 128)

    # Rows of the packed view; pad batch (zeros) so reshape + tiling are exact.
    r = pl.cdiv(B, GROUP)
    tr = min(tr, _round_up(r, 8))      # tile rows: multiple of 8 sublanes
    r_pad = _round_up(r, tr)
    b_pad = r_pad * GROUP
    if b_pad != B:
        x = jnp.pad(x, ((0, b_pad - B), (0, 0)))   # zero pad; sliced off below
    x_resh = x.reshape(r_pad, LANES)               # free reshape, no transpose

    out = pl.pallas_call(
        linear_relu_kernel,
        out_shape=jax.ShapeDtypeStruct((r_pad, LANES), jnp.float32),
        grid_spec=pltpu.PrefetchScalarGridSpec(
            num_scalar_prefetch=0,
            grid=(r_pad // tr,),
            in_specs=[
                pl.BlockSpec((tr, LANES), lambda i: (i, 0)),       # packed x tile
                pl.BlockSpec((LANES, LANES), lambda i: (0, 0)),    # W_big (resident)
                pl.BlockSpec((1, LANES), lambda i: (0, 0)),        # bias (resident)
            ],
            out_specs=pl.BlockSpec((tr, LANES), lambda i: (i, 0)),
        ),
        compiler_params=pltpu.CompilerParams(
            # No carried state -> batch tiles are independent; lets v7x shard
            # the grid across both TensorCores.
            dimension_semantics=("parallel",),
            vmem_limit_bytes=32 * 1024 * 1024,
        ),
        cost_estimate=pl.CostEstimate(
            flops=2 * r_pad * LANES * LANES,
            transcendentals=0,
            bytes_accessed=2 * r_pad * LANES * 4 + LANES * LANES * 4 + LANES * 4,
        ),
    )(x_resh, w_big, b_big)

    return out.reshape(b_pad, F)[:B]


def _reference(x, w, b):
    xr = jnp.where(jnp.max(x) < 0, x + 1.0, x)
    return jnp.maximum(xr @ w.T + b, 0.0)


if __name__ == "__main__":
    key = jax.random.PRNGKey(0)
    kx, kw, kb = jax.random.split(key, 3)

    B = 64
    x = jax.random.normal(kx, (B, F), dtype=jnp.float32)

    # Deterministic parameter init mimicking nn.Linear(8, 8) default
    # (uniform in [-1/sqrt(in_features), 1/sqrt(in_features)]).
    bound = 1.0 / jnp.sqrt(jnp.float32(F))
    w = jax.random.uniform(kw, (F, F), minval=-bound, maxval=bound,
                           dtype=jnp.float32)
    b = jax.random.uniform(kb, (F,), minval=-bound, maxval=bound,
                           dtype=jnp.float32)

    # Positive-max branch (no +1 applied).
    out = jax.block_until_ready(untraceable_submodule(x, w, b))
    assert jnp.allclose(out, _reference(x, w, b), atol=1e-4), "mismatch (pos branch)"

    # Negative-max branch (+1 applied via effective bias).
    x_neg = -jnp.abs(x) - 0.5
    out2 = jax.block_until_ready(untraceable_submodule(x_neg, w, b))
    assert jnp.allclose(out2, _reference(x_neg, w, b), atol=1e-4), "mismatch (neg branch)"

    # Batch not a multiple of 16 -> exercises zero-pad + slice path.
    x_small = x[:40]
    out3 = jax.block_until_ready(untraceable_submodule(x_small, w, b))
    assert jnp.allclose(out3, _reference(x_small, w, b), atol=1e-4), "mismatch (padded)"

    # Multi-tile grid path (tr=8 rows -> 2 grid steps at B=256).
    x_big = jax.random.normal(kx, (256, F), dtype=jnp.float32)
    out4 = jax.block_until_ready(untraceable_submodule(x_big, w, b, tr=8))
    assert jnp.allclose(out4, _reference(x_big, w, b), atol=1e-4), "mismatch (multi-tile)"

    print("KERNEL_OK")
</pallas_src>

<mosaic_0001>
module attributes {stable_mosaic.version = 11 : i64} {
  func.func @linear_relu_kernel(%arg0: i32, %arg1: memref<8x128xf32, #tpu.memory_space<vmem>>, %arg2: memref<128x128xf32, #tpu.memory_space<vmem>>, %arg3: memref<1x128xf32, #tpu.memory_space<vmem>>, %arg4: memref<8x128xf32, #tpu.memory_space<vmem>>) attributes {dimension_semantics = [#tpu.dimension_semantics<parallel>], iteration_bounds = array<i64: 1>, scalar_prefetch = 0 : i64, scratch_operands = 0 : i64, tpu.core_type = #tpu.core_type<tc>, window_params = [{transform_indices = @transform_0, window_bounds = array<i64: 8, 128>}, {pipeline_mode = #tpu.pipeline_mode<synchronous>, transform_indices = @transform_1, window_bounds = array<i64: 128, 128>}, {pipeline_mode = #tpu.pipeline_mode<synchronous>, transform_indices = @transform_2, window_bounds = array<i64: 1, 128>}, {transform_indices = @transform_3, window_bounds = array<i64: 8, 128>}]} {
    %c0 = arith.constant 0 : index
    %c0_0 = arith.constant 0 : index
    %0 = vector.load %arg1[%c0, %c0_0] : memref<8x128xf32, #tpu.memory_space<vmem>>, vector<8x128xf32>
    %c0_1 = arith.constant 0 : index
    %c0_2 = arith.constant 0 : index
    %1 = vector.load %arg2[%c0_1, %c0_2] : memref<128x128xf32, #tpu.memory_space<vmem>>, vector<128x128xf32>
    %cst = arith.constant dense<0.000000e+00> : vector<8x128xf32>
    %2 = tpu.matmul %0, %1, %cst {dimension_numbers = #tpu.dot_dimension_numbers<[1], [0], [0], [1], [0, 0, 1, 1], [], []>} : vector<8x128xf32>, vector<128x128xf32>, vector<8x128xf32> -> vector<8x128xf32>
    %c0_3 = arith.constant 0 : index
    %c0_4 = arith.constant 0 : index
    %3 = vector.load %arg3[%c0_3, %c0_4] : memref<1x128xf32, #tpu.memory_space<vmem>>, vector<1x128xf32>
    %4 = vector.broadcast %3 : vector<1x128xf32> to vector<8x128xf32>
    %5 = arith.addf %2, %4 : vector<8x128xf32>
    %cst_5 = arith.constant 0.000000e+00 : f32
    %6 = vector.broadcast %cst_5 : f32 to vector<8x128xf32>
    %7 = arith.maximumf %5, %6 : vector<8x128xf32>
    %c0_6 = arith.constant 0 : index
    %c0_7 = arith.constant 0 : index
    %8 = vector.load %arg4[%c0_6, %c0_7] : memref<8x128xf32, #tpu.memory_space<vmem>>, vector<8x128xf32>
    tpu.vector_store %arg4[%c0_6, %c0_7], %7 {strides = array<i32>} : memref<8x128xf32, #tpu.memory_space<vmem>>, vector<8x128xf32>,
    return
  }
  func.func @transform_0(%arg0: i32) -> (i32, i32) {
    %c0_i32 = arith.constant 0 : i32
    %c0_i32_0 = arith.constant 0 : i32
    return %arg0, %c0_i32 : i32, i32
  }
  func.func @transform_1(%arg0: i32) -> (i32, i32) {
    %c0_i32 = arith.constant 0 : i32
    %c0_i32_0 = arith.constant 0 : i32
    %c0_i32_1 = arith.constant 0 : i32
    return %c0_i32, %c0_i32_0 : i32, i32
  }
  func.func @transform_2(%arg0: i32) -> (i32, i32) {
    %c0_i32 = arith.constant 0 : i32
    %c0_i32_0 = arith.constant 0 : i32
    %c0_i32_1 = arith.constant 0 : i32
    return %c0_i32, %c0_i32_0 : i32, i32
  }
  func.func @transform_3(%arg0: i32) -> (i32, i32) {
    %c0_i32 = arith.constant 0 : i32
    %c0_i32_0 = arith.constant 0 : i32
    return %arg0, %c0_i32 : i32, i32
  }
}

</mosaic_0001>

<llo_original>
// kernel: tpu_custom_call.1
$region0: #{tpu_custom_call.1}
  #allocation0 [shape = 'u32[]', space=smem, size = 0x4, offset = 0x4, fixed_abs, tag = 'smem constant byte address 0x4 - core index']
  #allocation1 [shape = 'u32[72,128]{1,0:T(1,128)}', space=vmem, size = 0x9000, scoped, tag = 'internal scratch']
  %s0 = inlined_call_operand.hbm [shape: f32[8,128], index: 0, kind: input, shape index: {}]
  %s1 = inlined_call_operand.hbm [shape: f32[128,128], index: 1, kind: input, shape index: {}]
  %s2 = inlined_call_operand.vmem [shape: f32[1,128], index: 2, kind: input, shape index: {}]
  %s3 = inlined_call_operand.hbm [shape: f32[8,128], index: 3, kind: output, shape index: {}]
  %s4 = sld [smem:[#allocation0]]
  $region30: #{tpu_custom_call.1} parent=0
    _
  %s6 = ssub.s32 1, %s4
  %s7 = scalar_select 0, %s6, %s4
  $region1: #{tpu_custom_call.1} parent=0
    #allocation2 [shape = 'u8[4096]{0}', space=vmem, size = 0x1000, scoped, tag = 'input window, operand 0, single buffered']
    #allocation3 [shape = 's32[1]{0}', space=sflag, size = 0x4, scoped, tag = 'scoped memory for tpu_custom_call.1']
    #allocation4 [shape = 's32[1]{0}', space=sflag, size = 0x4, scoped, tag = 'scoped memory for tpu_custom_call.1']
    #allocation5 [shape = 'u8[65536]{0}', space=vmem, size = 0x10000, scoped, tag = 'input window, operand 1, single buffered']
    #allocation6 [shape = 's32[1]{0}', space=sflag, size = 0x4, scoped, tag = 'scoped memory for tpu_custom_call.1']
    #allocation7 [shape = 'u8[4096]{0}', space=vmem, size = 0x1000, scoped, tag = 'output window, operand 0, single buffered']
    %8 = vsyncpa [#allocation3], 0
    %9 = vsyncpa [#allocation6], 0
    %10 = vsyncpa [#allocation4], 0
    // Predicated region
    $region2: #{tpu_custom_call.1} parent=1 // pred_check
      _
    $region3: #{tpu_custom_call.1} parent=1 // pred_check_branch
      %12 = sbr.rel (0) target = $region5
    $region4: #{tpu_custom_call.1} parent=1 // pred_region
      %14 = vsyncadd [#allocation3], 0
      %s16 = sshll.u32 %s0, 4
      %s17 = int_to_ptr.hbm [resolvable:$true] %s16
      %s18 = sshll.u32 [#allocation2], 4
      %s19 = int_to_ptr.vmem [resolvable:$true] %s18
      %21 = dma.hbm_to_vmem [thread:$0]  %s17, 128, %s19, [#allocation3]
    $region5: #{tpu_custom_call.1} parent=1 // pred_fallthru
      _
    // Predicated region
    $region6: #{tpu_custom_call.1} parent=1 // pred_check
      _
    $region7: #{tpu_custom_call.1} parent=1 // pred_check_branch
      %23 = sbr.rel (0) target = $region9
    $region8: #{tpu_custom_call.1} parent=1 // pred_region
      %25 = vsyncadd [#allocation6], 0
      %s26 = sshll.u32 %s1, 4
      %s27 = int_to_ptr.hbm [resolvable:$true] %s26
      %s28 = sshll.u32 [#allocation5], 4
      %s29 = int_to_ptr.vmem [resolvable:$true] %s28
      %34 = dma.hbm_to_vmem [thread:$0]  %s27, 2048, %s29, [#allocation6], 128, 128, 8
    $region9: #{tpu_custom_call.1} parent=1 // pred_fallthru
      _
    // Predicated region
    $region10: #{tpu_custom_call.1} parent=1 // pred_check
      _
    $region11: #{tpu_custom_call.1} parent=1 // pred_check_branch
      %36 = sbr.rel (0) target = $region13
    $region12: #{tpu_custom_call.1} parent=1 // pred_region
      _
    $region13: #{tpu_custom_call.1} parent=1 // pred_fallthru
      _
    // Predicated region
    $region14: #{tpu_custom_call.1} parent=1 // pred_check
      _
    $region15: #{tpu_custom_call.1} parent=1 // pred_check_branch
      %38 = sbr.rel (0) target = $region17
    $region16: #{tpu_custom_call.1} parent=1 // pred_region
      %40 = dma.done [#allocation3], 128
    $region17: #{tpu_custom_call.1} parent=1 // pred_fallthru
      _
    // Predicated region
    $region18: #{tpu_custom_call.1} parent=1 // pred_check
      _
    $region19: #{tpu_custom_call.1} parent=1 // pred_check_branch
      %42 = sbr.rel (0) target = $region21
    $region20: #{tpu_custom_call.1} parent=1 // pred_region
      %44 = dma.done [#allocation6], 2048
    $region21: #{tpu_custom_call.1} parent=1 // pred_fallthru
      _
    %v45 = vld [vmem:[#allocation2] sm:$0xff]
    %v46 = vld [vmem:[#allocation5] sm:$0xff]
    %v47 = vld [vmem:[#allocation5 + $0x8] sm:$0xff]
    %v48 = vld [vmem:[#allocation5 + $0x10] sm:$0xff]
    %v49 = vld [vmem:[#allocation5 + $0x18] sm:$0xff]
    %v50 = vld [vmem:[#allocation5 + $0x20] sm:$0xff]
    %v51 = vld [vmem:[#allocation5 + $0x28] sm:$0xff]
    %v52 = vld [vmem:[#allocation5 + $0x30] sm:$0xff]
    %v53 = vld [vmem:[#allocation5 + $0x38] sm:$0xff]
    %v54 = vld [vmem:[#allocation5 + $0x40] sm:$0xff]
    %v55 = vld [vmem:[#allocation5 + $0x48] sm:$0xff]
    %v56 = vld [vmem:[#allocation5 + $0x50] sm:$0xff]
    %v57 = vld [vmem:[#allocation5 + $0x58] sm:$0xff]
    %v58 = vld [vmem:[#allocation5 + $0x60] sm:$0xff]
    %v59 = vld [vmem:[#allocation5 + $0x68] sm:$0xff]
    %v60 = vld [vmem:[#allocation5 + $0x70] sm:$0xff]
    %v61 = vld [vmem:[#allocation5 + $0x78] sm:$0xff]
    %v62 = vld [vmem:[%s2] sm:$0x1]
    %v64 = vperm.slane %v62, 0
    %66 = vmatpush.msra.mxu0 %v61
    %67 = vmatpush.msra.mxu0 %v60
    %68 = vmatpush.msra.mxu0 %v59
    %69 = vmatpush.msra.mxu0 %v58
    %70 = vmatpush.msra.mxu0 %v57
    %71 = vmatpush.msra.mxu0 %v56
    %72 = vmatpush.msra.mxu0 %v55
    %73 = vmatpush.msra.mxu0 %v54
    %74 = vmatpush.msra.mxu0 %v53
    %75 = vmatpush.msra.mxu0 %v52
    %76 = vmatpush.msra.mxu0 %v51
    %77 = vmatpush.msra.mxu0 %v50
    %78 = vmatpush.msra.mxu0 %v49
    %79 = vmatpush.msra.mxu0 %v48
    %80 = vmatpush.msra.mxu0 %v47
    %81 = vmatpush.msra.mxu0 %v46
    %82 = vmatmul.f32.gmra.mxu0 %v45
    %v83 = vpop.f32.mrf.mxu0
    %v84 = vadd.f32 %v64, %v83
    %85 = vdwg.mxu0
    %v86 = vmax.f32 %v84, 0.0
    %87 = vst [vmem:[#allocation7] sm:$0xff] %v86
    // Predicated region
    $region22: #{tpu_custom_call.1} parent=1 // pred_check
      _
    $region23: #{tpu_custom_call.1} parent=1 // pred_check_branch
      %89 = sbr.rel (0) target = $region25
    $region24: #{tpu_custom_call.1} parent=1 // pred_region
      %91 = vsyncadd [#allocation4], 0
      %s93 = sshll.u32 [#allocation7], 4
      %s94 = int_to_ptr.vmem [resolvable:$true] %s93
      %s95 = sshll.u32 %s3, 4
      %s96 = int_to_ptr.hbm [resolvable:$true] %s95
      %98 = dma.vmem_to_hbm [thread:$0]  %s94, 128, %s96, [#allocation4]
    $region25: #{tpu_custom_call.1} parent=1 // pred_fallthru
      _
    // Predicated region
    $region26: #{tpu_custom_call.1} parent=1 // pred_check
      _
    $region27: #{tpu_custom_call.1} parent=1 // pred_check_branch
      %100 = sbr.rel (0) target = $region29
    $region28: #{tpu_custom_call.1} parent=1 // pred_region
      %102 = dma.done [#allocation4], 128
    $region29: #{tpu_custom_call.1} parent=1 // pred_fallthru
      _
    %103 = vsyncpa [#allocation3], 1
    %104 = vsyncpa [#allocation6], 1
    %105 = vsyncpa [#allocation4], 1

</llo_original>
